<compile_context>
chip_gen: v5e
topology: v5e:2x2
jax: 0.10.0
libtpu: 0.0.40
codegen_flags: <defaults>
</compile_context>

<pallas_src>
import functools

import jax
import jax.numpy as jnp
from jax import lax
from jax.experimental import pallas as pl
from jax.experimental.pallas import tpu as pltpu

T = 10            # self.T in the PyTorch module
_EPS = 1e-12      # F.normalize eps
_EPS2 = _EPS * _EPS


def _normal_classifier_kernel(a_ref, xq_ref, xsT_ref, std_ref, *out_refs):
    # a_ref   : SMEM (T,)      -- random scalars (scalar-prefetched)
    # xq_ref  : VMEM (tq, D)   -- query tile
    # xsT_ref : VMEM (D, S)    -- shot matrix, pre-transposed, fully resident
    # std_ref : VMEM (tq, S)   -- "logits" input acting as std
    # out_refs: T x VMEM (tq, S)
    xq = xq_ref[...]
    xsT = xsT_ref[...]

    # Query normalization with the *10 scale folded in (one EUP rsqrt + VPU mul).
    q_inv = lax.rsqrt(jnp.maximum(
        jnp.sum(xq * xq, axis=-1, keepdims=True), _EPS2))
    qn = xq * (10.0 * q_inv)

    # Shot normalization: feature dim D is axis 0 of the transposed matrix.
    s_inv = lax.rsqrt(jnp.maximum(
        jnp.sum(xsT * xsT, axis=0, keepdims=True), _EPS2))
    snT = xsT * s_inv

    # mean = (10 * qn_unit) @ snT  -- MXU matmul, no RHS transpose needed.
    mean = jnp.dot(qn, snT, preferred_element_type=jnp.float32)

    std = std_ref[...].astype(jnp.float32)

    # One full-tile store per output ref (no slicing of a stacked result).
    # Note: stores are only lane-dense if S is a multiple of 128; for small S
    # this is dictated by the problem shape, not the kernel structure.
    for t, o_ref in enumerate(out_refs):
        o_ref[...] = (mean + std * a_ref[t]).astype(o_ref.dtype)


def _choose_q_tile(q):
    """Largest convenient Q tile: whole array if small, else a divisor that is
    a multiple of 8 and modest enough to stay inside default scoped VMEM."""
    if q <= 256:
        return q
    for t in (256, 128, 64, 32, 16, 8):
        if q % t == 0:
            return t
    return q  # fall back to a single (untiled) step


def normal_classifier_forward(x_shot, x_query, logits, axis):
    """Returns a list of T arrays of shape (Q, S), matching the PyTorch module."""
    Q, D = x_query.shape
    S, Ds = x_shot.shape
    assert D == Ds
    assert logits.shape == (Q, S)
    assert axis.shape == (T,)

    # Layout plumbing only: present x_shot as (D, S) so the kernel's matmul
    # contracts D without an in-kernel transpose.
    x_shot_t = jnp.transpose(x_shot)

    tq = _choose_q_tile(Q)
    grid = (Q // tq,)

    out_shapes = tuple(
        jax.ShapeDtypeStruct((Q, S), jnp.float32) for _ in range(T))

    grid_spec = pltpu.PrefetchScalarGridSpec(
        num_scalar_prefetch=1,        # `axis` scalars land in SMEM
        grid=grid,
        in_specs=[
            pl.BlockSpec((tq, D), lambda i, a: (i, 0)),   # x_query tile
            pl.BlockSpec((D, S), lambda i, a: (0, 0)),    # x_shot^T resident
            pl.BlockSpec((tq, S), lambda i, a: (i, 0)),   # std tile
        ],
        out_specs=tuple(
            pl.BlockSpec((tq, S), lambda i, a: (i, 0)) for _ in range(T)),
    )

    outs = pl.pallas_call(
        _normal_classifier_kernel,
        out_shape=out_shapes,
        grid_spec=grid_spec,
        compiler_params=pltpu.CompilerParams(
            dimension_semantics=("parallel",)),
    )(axis, x_query, x_shot_t, logits)

    return list(outs)


if __name__ == "__main__":
    key = jax.random.PRNGKey(0)
    k_shot, k_query, k_logits, k_axis = jax.random.split(key, 4)

    # Small few-shot-like shapes: S shot prototypes, Q queries, D features.
    S, Q, D = 8, 8, 32
    x_shot = jax.random.normal(k_shot, (S, D), dtype=jnp.float32)
    x_query = jax.random.normal(k_query, (Q, D), dtype=jnp.float32)
    logits = jax.random.normal(k_logits, (Q, S), dtype=jnp.float32)

    # Deterministic stand-in for np.random.normal(loc=0, scale=1, size=T)
    axis = jax.random.normal(k_axis, (T,), dtype=jnp.float32)

    logits_list = normal_classifier_forward(x_shot, x_query, logits, axis)
    jax.block_until_ready(logits_list)

    # Reference check in plain JAX (same math as F.normalize / torch.mm).
    qn = x_query / jnp.maximum(
        jnp.linalg.norm(x_query, axis=-1, keepdims=True), _EPS)
    sn = x_shot / jnp.maximum(
        jnp.linalg.norm(x_shot, axis=-1, keepdims=True), _EPS)
    mean_ref = (qn @ sn.T) * 10.0
    for t in range(T):
        ref_t = mean_ref + logits * axis[t]
        assert jnp.allclose(logits_list[t], ref_t, atol=1e-4, rtol=1e-4), t

    print("KERNEL_OK")
</pallas_src>

<mosaic_0001>
module attributes {stable_mosaic.version = 11 : i64} {
  func.func @_normal_classifier_kernel(%arg0: i32, %arg1: memref<10xf32, #tpu.memory_space<smem>>, %arg2: memref<8x32xf32, #tpu.memory_space<vmem>>, %arg3: memref<32x8xf32, #tpu.memory_space<vmem>>, %arg4: memref<8x8xf32, #tpu.memory_space<vmem>>, %arg5: memref<8x8xf32, #tpu.memory_space<vmem>>, %arg6: memref<8x8xf32, #tpu.memory_space<vmem>>, %arg7: memref<8x8xf32, #tpu.memory_space<vmem>>, %arg8: memref<8x8xf32, #tpu.memory_space<vmem>>, %arg9: memref<8x8xf32, #tpu.memory_space<vmem>>, %arg10: memref<8x8xf32, #tpu.memory_space<vmem>>, %arg11: memref<8x8xf32, #tpu.memory_space<vmem>>, %arg12: memref<8x8xf32, #tpu.memory_space<vmem>>, %arg13: memref<8x8xf32, #tpu.memory_space<vmem>>, %arg14: memref<8x8xf32, #tpu.memory_space<vmem>>) attributes {dimension_semantics = [#tpu.dimension_semantics<parallel>], iteration_bounds = array<i64: 1>, scalar_prefetch = 1 : i64, scratch_operands = 0 : i64, tpu.core_type = #tpu.core_type<tc>, window_params = [{transform_indices = @transform_0, window_bounds = array<i64: 8, 32>}, {pipeline_mode = #tpu.pipeline_mode<synchronous>, transform_indices = @transform_1, window_bounds = array<i64: 32, 8>}, {transform_indices = @transform_2, window_bounds = array<i64: 8, 8>}, {transform_indices = @transform_3, window_bounds = array<i64: 8, 8>}, {transform_indices = @transform_4, window_bounds = array<i64: 8, 8>}, {transform_indices = @transform_5, window_bounds = array<i64: 8, 8>}, {transform_indices = @transform_6, window_bounds = array<i64: 8, 8>}, {transform_indices = @transform_7, window_bounds = array<i64: 8, 8>}, {transform_indices = @transform_8, window_bounds = array<i64: 8, 8>}, {transform_indices = @transform_9, window_bounds = array<i64: 8, 8>}, {transform_indices = @transform_10, window_bounds = array<i64: 8, 8>}, {transform_indices = @transform_11, window_bounds = array<i64: 8, 8>}, {transform_indices = @transform_12, window_bounds = array<i64: 8, 8>}]} {
    %c0 = arith.constant 0 : index
    %c0_0 = arith.constant 0 : index
    %0 = vector.load %arg2[%c0, %c0_0] : memref<8x32xf32, #tpu.memory_space<vmem>>, vector<8x32xf32>
    %c0_1 = arith.constant 0 : index
    %c0_2 = arith.constant 0 : index
    %1 = vector.load %arg3[%c0_1, %c0_2] : memref<32x8xf32, #tpu.memory_space<vmem>>, vector<32x8xf32>
    %2 = arith.mulf %0, %0 : vector<8x32xf32>
    %cst = arith.constant dense<0.000000e+00> : vector<8xf32>
    %3 = vector.multi_reduction <add>, %2, %cst [1] : vector<8x32xf32> to vector<8xf32>
    %4 = vector.shape_cast %3 : vector<8xf32> to vector<8x1xf32>
    %cst_3 = arith.constant 1.000000e-24 : f32
    %5 = vector.broadcast %cst_3 : f32 to vector<8x1xf32>
    %6 = arith.maximumf %4, %5 : vector<8x1xf32>
    %7 = math.rsqrt %6 : vector<8x1xf32>
    %cst_4 = arith.constant 1.000000e+01 : f32
    %8 = vector.broadcast %cst_4 : f32 to vector<8x1xf32>
    %9 = arith.mulf %8, %7 : vector<8x1xf32>
    %10 = vector.broadcast %9 : vector<8x1xf32> to vector<8x32xf32>
    %11 = arith.mulf %0, %10 : vector<8x32xf32>
    %12 = arith.mulf %1, %1 : vector<32x8xf32>
    %cst_5 = arith.constant dense<0.000000e+00> : vector<8xf32>
    %13 = vector.multi_reduction <add>, %12, %cst_5 [0] : vector<32x8xf32> to vector<8xf32>
    %14 = vector.shape_cast %13 : vector<8xf32> to vector<1x8xf32>
    %cst_6 = arith.constant 1.000000e-24 : f32
    %15 = vector.broadcast %cst_6 : f32 to vector<1x8xf32>
    %16 = arith.maximumf %14, %15 : vector<1x8xf32>
    %17 = math.rsqrt %16 : vector<1x8xf32>
    %18 = vector.broadcast %17 : vector<1x8xf32> to vector<32x8xf32>
    %19 = arith.mulf %1, %18 : vector<32x8xf32>
    %cst_7 = arith.constant dense<0.000000e+00> : vector<8x8xf32>
    %20 = tpu.matmul %11, %19, %cst_7 {dimension_numbers = #tpu.dot_dimension_numbers<[1], [0], [0], [1], [0, 0, 1, 1], [], []>} : vector<8x32xf32>, vector<32x8xf32>, vector<8x8xf32> -> vector<8x8xf32>
    %c0_8 = arith.constant 0 : index
    %c0_9 = arith.constant 0 : index
    %21 = vector.load %arg4[%c0_8, %c0_9] : memref<8x8xf32, #tpu.memory_space<vmem>>, vector<8x8xf32>
    %c0_10 = arith.constant 0 : index
    %22 = memref.load %arg1[%c0_10] : memref<10xf32, #tpu.memory_space<smem>>
    %23 = vector.broadcast %22 : f32 to vector<8x8xf32>
    %24 = arith.mulf %21, %23 : vector<8x8xf32>
    %25 = arith.addf %20, %24 : vector<8x8xf32>
    %c0_11 = arith.constant 0 : index
    %c0_12 = arith.constant 0 : index
    %26 = vector.load %arg5[%c0_11, %c0_12] : memref<8x8xf32, #tpu.memory_space<vmem>>, vector<8x8xf32>
    tpu.vector_store %arg5[%c0_11, %c0_12], %25 {strides = array<i32>} : memref<8x8xf32, #tpu.memory_space<vmem>>, vector<8x8xf32>,
    %c1 = arith.constant 1 : index
    %27 = memref.load %arg1[%c1] : memref<10xf32, #tpu.memory_space<smem>>
    %28 = vector.broadcast %27 : f32 to vector<8x8xf32>
    %29 = arith.mulf %21, %28 : vector<8x8xf32>
    %30 = arith.addf %20, %29 : vector<8x8xf32>
    %c0_13 = arith.constant 0 : index
    %c0_14 = arith.constant 0 : index
    %31 = vector.load %arg6[%c0_13, %c0_14] : memref<8x8xf32, #tpu.memory_space<vmem>>, vector<8x8xf32>
    tpu.vector_store %arg6[%c0_13, %c0_14], %30 {strides = array<i32>} : memref<8x8xf32, #tpu.memory_space<vmem>>, vector<8x8xf32>,
    %c2 = arith.constant 2 : index
    %32 = memref.load %arg1[%c2] : memref<10xf32, #tpu.memory_space<smem>>
    %33 = vector.broadcast %32 : f32 to vector<8x8xf32>
    %34 = arith.mulf %21, %33 : vector<8x8xf32>
    %35 = arith.addf %20, %34 : vector<8x8xf32>
    %c0_15 = arith.constant 0 : index
    %c0_16 = arith.constant 0 : index
    %36 = vector.load %arg7[%c0_15, %c0_16] : memref<8x8xf32, #tpu.memory_space<vmem>>, vector<8x8xf32>
    tpu.vector_store %arg7[%c0_15, %c0_16], %35 {strides = array<i32>} : memref<8x8xf32, #tpu.memory_space<vmem>>, vector<8x8xf32>,
    %c3 = arith.constant 3 : index
    %37 = memref.load %arg1[%c3] : memref<10xf32, #tpu.memory_space<smem>>
    %38 = vector.broadcast %37 : f32 to vector<8x8xf32>
    %39 = arith.mulf %21, %38 : vector<8x8xf32>
    %40 = arith.addf %20, %39 : vector<8x8xf32>
    %c0_17 = arith.constant 0 : index
    %c0_18 = arith.constant 0 : index
    %41 = vector.load %arg8[%c0_17, %c0_18] : memref<8x8xf32, #tpu.memory_space<vmem>>, vector<8x8xf32>
    tpu.vector_store %arg8[%c0_17, %c0_18], %40 {strides = array<i32>} : memref<8x8xf32, #tpu.memory_space<vmem>>, vector<8x8xf32>,
    %c4 = arith.constant 4 : index
    %42 = memref.load %arg1[%c4] : memref<10xf32, #tpu.memory_space<smem>>
    %43 = vector.broadcast %42 : f32 to vector<8x8xf32>
    %44 = arith.mulf %21, %43 : vector<8x8xf32>
    %45 = arith.addf %20, %44 : vector<8x8xf32>
    %c0_19 = arith.constant 0 : index
    %c0_20 = arith.constant 0 : index
    %46 = vector.load %arg9[%c0_19, %c0_20] : memref<8x8xf32, #tpu.memory_space<vmem>>, vector<8x8xf32>
    tpu.vector_store %arg9[%c0_19, %c0_20], %45 {strides = array<i32>} : memref<8x8xf32, #tpu.memory_space<vmem>>, vector<8x8xf32>,
    %c5 = arith.constant 5 : index
    %47 = memref.load %arg1[%c5] : memref<10xf32, #tpu.memory_space<smem>>
    %48 = vector.broadcast %47 : f32 to vector<8x8xf32>
    %49 = arith.mulf %21, %48 : vector<8x8xf32>
    %50 = arith.addf %20, %49 : vector<8x8xf32>
    %c0_21 = arith.constant 0 : index
    %c0_22 = arith.constant 0 : index
    %51 = vector.load %arg10[%c0_21, %c0_22] : memref<8x8xf32, #tpu.memory_space<vmem>>, vector<8x8xf32>
    tpu.vector_store %arg10[%c0_21, %c0_22], %50 {strides = array<i32>} : memref<8x8xf32, #tpu.memory_space<vmem>>, vector<8x8xf32>,
    %c6 = arith.constant 6 : index
    %52 = memref.load %arg1[%c6] : memref<10xf32, #tpu.memory_space<smem>>
    %53 = vector.broadcast %52 : f32 to vector<8x8xf32>
    %54 = arith.mulf %21, %53 : vector<8x8xf32>
    %55 = arith.addf %20, %54 : vector<8x8xf32>
    %c0_23 = arith.constant 0 : index
    %c0_24 = arith.constant 0 : index
    %56 = vector.load %arg11[%c0_23, %c0_24] : memref<8x8xf32, #tpu.memory_space<vmem>>, vector<8x8xf32>
    tpu.vector_store %arg11[%c0_23, %c0_24], %55 {strides = array<i32>} : memref<8x8xf32, #tpu.memory_space<vmem>>, vector<8x8xf32>,
    %c7 = arith.constant 7 : index
    %57 = memref.load %arg1[%c7] : memref<10xf32, #tpu.memory_space<smem>>
    %58 = vector.broadcast %57 : f32 to vector<8x8xf32>
    %59 = arith.mulf %21, %58 : vector<8x8xf32>
    %60 = arith.addf %20, %59 : vector<8x8xf32>
    %c0_25 = arith.constant 0 : index
    %c0_26 = arith.constant 0 : index
    %61 = vector.load %arg12[%c0_25, %c0_26] : memref<8x8xf32, #tpu.memory_space<vmem>>, vector<8x8xf32>
    tpu.vector_store %arg12[%c0_25, %c0_26], %60 {strides = array<i32>} : memref<8x8xf32, #tpu.memory_space<vmem>>, vector<8x8xf32>,
    %c8 = arith.constant 8 : index
    %62 = memref.load %arg1[%c8] : memref<10xf32, #tpu.memory_space<smem>>
    %63 = vector.broadcast %62 : f32 to vector<8x8xf32>
    %64 = arith.mulf %21, %63 : vector<8x8xf32>
    %65 = arith.addf %20, %64 : vector<8x8xf32>
    %c0_27 = arith.constant 0 : index
    %c0_28 = arith.constant 0 : index
    %66 = vector.load %arg13[%c0_27, %c0_28] : memref<8x8xf32, #tpu.memory_space<vmem>>, vector<8x8xf32>
    tpu.vector_store %arg13[%c0_27, %c0_28], %65 {strides = array<i32>} : memref<8x8xf32, #tpu.memory_space<vmem>>, vector<8x8xf32>,
    %c9 = arith.constant 9 : index
    %67 = memref.load %arg1[%c9] : memref<10xf32, #tpu.memory_space<smem>>
    %68 = vector.broadcast %67 : f32 to vector<8x8xf32>
    %69 = arith.mulf %21, %68 : vector<8x8xf32>
    %70 = arith.addf %20, %69 : vector<8x8xf32>
    %c0_29 = arith.constant 0 : index
    %c0_30 = arith.constant 0 : index
    %71 = vector.load %arg14[%c0_29, %c0_30] : memref<8x8xf32, #tpu.memory_space<vmem>>, vector<8x8xf32>
    tpu.vector_store %arg14[%c0_29, %c0_30], %70 {strides = array<i32>} : memref<8x8xf32, #tpu.memory_space<vmem>>, vector<8x8xf32>,
    return
  }
  func.func @transform_0(%arg0: i32, %arg1: memref<10xf32, #tpu.memory_space<smem>>) -> (i32, i32) {
    %c0_i32 = arith.constant 0 : i32
    %c0_i32_0 = arith.constant 0 : i32
    return %arg0, %c0_i32 : i32, i32
  }
  func.func @transform_1(%arg0: i32, %arg1: memref<10xf32, #tpu.memory_space<smem>>) -> (i32, i32) {
    %c0_i32 = arith.constant 0 : i32
    %c0_i32_0 = arith.constant 0 : i32
    %c0_i32_1 = arith.constant 0 : i32
    return %c0_i32, %c0_i32_0 : i32, i32
  }
  func.func @transform_2(%arg0: i32, %arg1: memref<10xf32, #tpu.memory_space<smem>>) -> (i32, i32) {
    %c0_i32 = arith.constant 0 : i32
    %c0_i32_0 = arith.constant 0 : i32
    return %arg0, %c0_i32 : i32, i32
  }
  func.func @transform_3(%arg0: i32, %arg1: memref<10xf32, #tpu.memory_space<smem>>) -> (i32, i32) {
    %c0_i32 = arith.constant 0 : i32
    %c0_i32_0 = arith.constant 0 : i32
    return %arg0, %c0_i32 : i32, i32
  }
  func.func @transform_4(%arg0: i32, %arg1: memref<10xf32, #tpu.memory_space<smem>>) -> (i32, i32) {
    %c0_i32 = arith.constant 0 : i32
    %c0_i32_0 = arith.constant 0 : i32
    return %arg0, %c0_i32 : i32, i32
  }
  func.func @transform_5(%arg0: i32, %arg1: memref<10xf32, #tpu.memory_space<smem>>) -> (i32, i32) {
    %c0_i32 = arith.constant 0 : i32
    %c0_i32_0 = arith.constant 0 : i32
    return %arg0, %c0_i32 : i32, i32
  }
  func.func @transform_6(%arg0: i32, %arg1: memref<10xf32, #tpu.memory_space<smem>>) -> (i32, i32) {
    %c0_i32 = arith.constant 0 : i32
    %c0_i32_0 = arith.constant 0 : i32
    return %arg0, %c0_i32 : i32, i32
  }
  func.func @transform_7(%arg0: i32, %arg1: memref<10xf32, #tpu.memory_space<smem>>) -> (i32, i32) {
    %c0_i32 = arith.constant 0 : i32
    %c0_i32_0 = arith.constant 0 : i32
    return %arg0, %c0_i32 : i32, i32
  }
  func.func @transform_8(%arg0: i32, %arg1: memref<10xf32, #tpu.memory_space<smem>>) -> (i32, i32) {
    %c0_i32 = arith.constant 0 : i32
    %c0_i32_0 = arith.constant 0 : i32
    return %arg0, %c0_i32 : i32, i32
  }
  func.func @transform_9(%arg0: i32, %arg1: memref<10xf32, #tpu.memory_space<smem>>) -> (i32, i32) {
    %c0_i32 = arith.constant 0 : i32
    %c0_i32_0 = arith.constant 0 : i32
    return %arg0, %c0_i32 : i32, i32
  }
  func.func @transform_10(%arg0: i32, %arg1: memref<10xf32, #tpu.memory_space<smem>>) -> (i32, i32) {
    %c0_i32 = arith.constant 0 : i32
    %c0_i32_0 = arith.constant 0 : i32
    return %arg0, %c0_i32 : i32, i32
  }
  func.func @transform_11(%arg0: i32, %arg1: memref<10xf32, #tpu.memory_space<smem>>) -> (i32, i32) {
    %c0_i32 = arith.constant 0 : i32
    %c0_i32_0 = arith.constant 0 : i32
    return %arg0, %c0_i32 : i32, i32
  }
  func.func @transform_12(%arg0: i32, %arg1: memref<10xf32, #tpu.memory_space<smem>>) -> (i32, i32) {
    %c0_i32 = arith.constant 0 : i32
    %c0_i32_0 = arith.constant 0 : i32
    return %arg0, %c0_i32 : i32, i32
  }
}

</mosaic_0001>

<llo_original>
// kernel: tpu_custom_call.1
$region0: #{tpu_custom_call.1}
  #allocation0 [shape = 'u32[]', space=smem, size = 0x4, offset = 0x4, fixed_abs, tag = 'smem constant byte address 0x4 - core index']
  #allocation1 [shape = 'u32[72,128]{1,0:T(1,128)}', space=vmem, size = 0x9000, scoped, tag = 'internal scratch']
  #allocation2 [shape = 's32[1]{0}', space=sflag, size = 0x4, scoped, tag = 'scoped memory for tpu_custom_call.1']
  #allocation3 [shape = 'u8[512]{0}', space=smem, size = 0x200, scoped, tag = 'prefetched SMEM operand 0']
  %s0 = inlined_call_operand.vmem [shape: f32[10], index: 0, kind: input, shape index: {}]
  %s1 = inlined_call_operand.vmem [shape: f32[8,32], index: 1, kind: input, shape index: {}]
  %s2 = inlined_call_operand.vmem [shape: f32[32,8], index: 2, kind: input, shape index: {}]
  %s3 = inlined_call_operand.vmem [shape: f32[8,8], index: 3, kind: input, shape index: {}]
  %s4 = inlined_call_operand.hbm [shape: f32[8,8], index: 4, kind: output, shape index: {0}]
  %s5 = inlined_call_operand.hbm [shape: f32[8,8], index: 5, kind: output, shape index: {1}]
  %s6 = inlined_call_operand.hbm [shape: f32[8,8], index: 6, kind: output, shape index: {2}]
  %s7 = inlined_call_operand.hbm [shape: f32[8,8], index: 7, kind: output, shape index: {3}]
  %s8 = inlined_call_operand.hbm [shape: f32[8,8], index: 8, kind: output, shape index: {4}]
  %s9 = inlined_call_operand.hbm [shape: f32[8,8], index: 9, kind: output, shape index: {5}]
  %s10 = inlined_call_operand.hbm [shape: f32[8,8], index: 10, kind: output, shape index: {6}]
  %s11 = inlined_call_operand.hbm [shape: f32[8,8], index: 11, kind: output, shape index: {7}]
  %s12 = inlined_call_operand.hbm [shape: f32[8,8], index: 12, kind: output, shape index: {8}]
  %s13 = inlined_call_operand.hbm [shape: f32[8,8], index: 13, kind: output, shape index: {9}]
  %14 = xla_tuple %s4, %s5, %s6, %s7, %s8, %s9, %s10, %s11, %s12, %s13
  %s15 = sld [smem:[#allocation0]]
  $region94: #{tpu_custom_call.1} parent=0
    _
  %s17 = ssub.s32 1, %s15
  %s18 = scalar_select 0, %s17, %s15
  %s20 = sshll.u32 %s0, 4
  %s21 = int_to_ptr.vmem [resolvable:$true] %s20
  %23 = dma.vmem_to_smem %s21, 16, [#allocation3], [#allocation2]
  %25 = dma.done [#allocation2], 16
  %26 = sfence
  $region1: #{tpu_custom_call.1} parent=0
    #allocation4 [shape = 'u8[4096]{0}', space=vmem, size = 0x1000, scoped, tag = 'output window, operand 0, single buffered']
    #allocation5 [shape = 's32[1]{0}', space=sflag, size = 0x4, scoped, tag = 'scoped memory for tpu_custom_call.1']
    #allocation6 [shape = 'u8[4096]{0}', space=vmem, size = 0x1000, scoped, tag = 'output window, operand 1, single buffered']
    #allocation7 [shape = 's32[1]{0}', space=sflag, size = 0x4, scoped, tag = 'scoped memory for tpu_custom_call.1']
    #allocation8 [shape = 'u8[4096]{0}', space=vmem, size = 0x1000, scoped, tag = 'output window, operand 2, single buffered']
    #allocation9 [shape = 'u8[4096]{0}', space=vmem, size = 0x1000, scoped, tag = 'output window, operand 3, single buffered']
    #allocation10 [shape = 's32[1]{0}', space=sflag, size = 0x4, scoped, tag = 'scoped memory for tpu_custom_call.1']
    #allocation11 [shape = 'u8[4096]{0}', space=vmem, size = 0x1000, scoped, tag = 'output window, operand 4, single buffered']
    #allocation12 [shape = 'u8[4096]{0}', space=vmem, size = 0x1000, scoped, tag = 'output window, operand 5, single buffered']
    #allocation13 [shape = 's32[1]{0}', space=sflag, size = 0x4, scoped, tag = 'scoped memory for tpu_custom_call.1']
    #allocation14 [shape = 'u8[4096]{0}', space=vmem, size = 0x1000, scoped, tag = 'output window, operand 6, single buffered']
    #allocation15 [shape = 'u8[4096]{0}', space=vmem, size = 0x1000, scoped, tag = 'output window, operand 7, single buffered']
    #allocation16 [shape = 's32[1]{0}', space=sflag, size = 0x4, scoped, tag = 'scoped memory for tpu_custom_call.1']
    #allocation17 [shape = 'u8[4096]{0}', space=vmem, size = 0x1000, scoped, tag = 'output window, operand 8, single buffered']
    #allocation18 [shape = 'u8[4096]{0}', space=vmem, size = 0x1000, scoped, tag = 'output window, operand 9, single buffered']
    #allocation19 [shape = 's32[1]{0}', space=sflag, size = 0x4, scoped, tag = 'scoped memory for tpu_custom_call.1']
    %27 = vsyncpa [#allocation5], 0
    %28 = vsyncpa [#allocation7], 0
    %29 = vsyncpa [#allocation10], 0
    %30 = vsyncpa [#allocation13], 0
    %31 = vsyncpa [#allocation16], 0
    %32 = vsyncpa [#allocation19], 0
    // Predicated region
    $region2: #{tpu_custom_call.1} parent=1 // pred_check
      _
    $region3: #{tpu_custom_call.1} parent=1 // pred_check_branch
      %34 = sbr.rel (0) target = $region5
    $region4: #{tpu_custom_call.1} parent=1 // pred_region
      _
    $region5: #{tpu_custom_call.1} parent=1 // pred_fallthru
      _
    // Predicated region
    $region6: #{tpu_custom_call.1} parent=1 // pred_check
      _
    $region7: #{tpu_custom_call.1} parent=1 // pred_check_branch
      %36 = sbr.rel (0) target = $region9
    $region8: #{tpu_custom_call.1} parent=1 // pred_region
      _
    $region9: #{tpu_custom_call.1} parent=1 // pred_fallthru
      _
    // Predicated region
    $region10: #{tpu_custom_call.1} parent=1 // pred_check
      _
    $region11: #{tpu_custom_call.1} parent=1 // pred_check_branch
      %38 = sbr.rel (0) target = $region13
    $region12: #{tpu_custom_call.1} parent=1 // pred_region
      _
    $region13: #{tpu_custom_call.1} parent=1 // pred_fallthru
      _
    %v39 = vld [vmem:[%s1] sm:$0xff]
    %v40 = vld [vmem:[%s2] sm:$0xff]
    %v41 = vld [vmem:[%s2 + $0x8] sm:$0xff]
    %v42 = vld [vmem:[%s2 + $0x10] sm:$0xff]
    %v43 = vld [vmem:[%s2 + $0x18] sm:$0xff]
    %v44 = vmul.f32 %v39, %v39
    %vm45 = vcmask 261120
    %v46 = vsel %vm45, %v44, 0.0
    %47 = vadd.xlane.f32.xlu0 %v46
    %v48 = vpop.xlane.xlu0 %47
    %v49 = vmax.f32 %v48, 1e-24
    %v50 = vrsqrt.pop %v49
    %v51 = vmul.f32 %v50, %v49
    %v52 = vmul.f32 %v51, %v50
    %v53 = vmul.f32 0.5, %v52
    %v54 = vsub.f32 1.5, %v53
    %v55 = vmul.f32 %v50, %v54
    %vm56 = vweird.f32 %v49
    %vm57 = vweird.f32 %v50
    %vm58 = vmor %vm56, %vm57
    %v59 = vsel %vm58, %v50, %v55
    %v60 = vmul.f32 %v59, 10.0
    %v61 = vmul.f32 %v39, %v60
    %v62 = vmul.f32 %v40, %v40
    %v63 = vmul.f32 %v41, %v41
    %v64 = vmul.f32 %v42, %v42
    %v65 = vmul.f32 %v43, %v43
    %vm66 = vcmask 64512
    %v67 = vsel %vm66, %v62, 0.0
    %v68 = vsel %vm66, %v63, 0.0
    %v69 = vadd.f32 %v67, %v68
    %v70 = vsel %vm66, %v64, 0.0
    %v71 = vadd.f32 %v69, %v70
    %v72 = vsel %vm66, %v65, 0.0
    %v73 = vadd.f32 %v71, %v72
    %v74 = vrot.slane %v73, 4
    %v75 = vadd.f32 %v73, %v74
    %v76 = vrot.slane %v75, 2
    %v77 = vadd.f32 %v75, %v76
    %v78 = vrot.slane %v77, 1
    %v79 = vadd.f32 %v77, %v78
    %v80 = vmax.f32 %v79, 1e-24
    %v81 = vrsqrt.pop %v80
    %v82 = vmul.f32 %v81, %v80
    %v83 = vmul.f32 %v82, %v81
    %v84 = vmul.f32 0.5, %v83
    %v85 = vsub.f32 1.5, %v84
    %v86 = vmul.f32 %v81, %v85
    %vm87 = vweird.f32 %v80
    %vm88 = vweird.f32 %v81
    %vm89 = vmor %vm87, %vm88
    %v90 = vsel %vm89, %v81, %v86
    %v91 = vmul.f32 %v40, %v90
    %v92 = vmul.f32 %v41, %v90
    %v93 = vmul.f32 %v42, %v90
    %v94 = vmul.f32 %v43, %v90
    %v96 = vsel %vm45, %v61, 0
    %98 = vmatpush.msra.mxu0 0.0
    %99 = vmatpush.msra.mxu0 0.0
    %100 = vmatpush.msra.mxu0 0.0
    %101 = vmatpush.msra.mxu0 0.0
    %102 = vmatpush.msra.mxu0 0.0
    %103 = vmatpush.msra.mxu0 0.0
    %104 = vmatpush.msra.mxu0 0.0
    %105 = vmatpush.msra.mxu0 0.0
    %106 = vmatpush.msra.mxu0 0.0
    %107 = vmatpush.msra.mxu0 0.0
    %108 = vmatpush.msra.mxu0 0.0
    %109 = vmatpush.msra.mxu0 0.0
    %110 = vmatpush.msra.mxu0 %v94
    %111 = vmatpush.msra.mxu0 %v93
    %112 = vmatpush.msra.mxu0 %v92
    %113 = vmatpush.msra.mxu0 %v91
    %114 = vmatmul.f32.gmra.mxu0 %v96
    %v115 = vpop.f32.mrf.mxu0
    %v116 = vadd.f32 0.0, %v115
    %117 = vdwg.mxu0
    %v118 = vld [vmem:[%s3] sm:$0xff]
    %s119 = sld [smem:[#allocation3]]
    %v120 = vstv %s119
    %v121 = vmul.f32 %v118, %v120
    %v122 = vadd.f32 %v116, %v121
    %123 = vst.msk [vmem:[#allocation4] sm:$0xff] %vm66, %v122
    %s124 = sld [smem:[#allocation3 + $0x1]]
    %v125 = vstv %s124
    %v126 = vmul.f32 %v118, %v125
    %v127 = vadd.f32 %v116, %v126
    %128 = vst.msk [vmem:[#allocation6] sm:$0xff] %vm66, %v127
    %s129 = sld [smem:[#allocation3 + $0x2]]
    %v130 = vstv %s129
    %v131 = vmul.f32 %v118, %v130
    %v132 = vadd.f32 %v116, %v131
    %133 = vst.msk [vmem:[#allocation8] sm:$0xff] %vm66, %v132
    %s134 = sld [smem:[#allocation3 + $0x3]]
    %v135 = vstv %s134
    %v136 = vmul.f32 %v118, %v135
    %v137 = vadd.f32 %v116, %v136
    %138 = vst.msk [vmem:[#allocation9] sm:$0xff] %vm66, %v137
    %s139 = sld [smem:[#allocation3 + $0x4]]
    %v140 = vstv %s139
    %v141 = vmul.f32 %v118, %v140
    %v142 = vadd.f32 %v116, %v141
    %143 = vst.msk [vmem:[#allocation11] sm:$0xff] %vm66, %v142
    %s144 = sld [smem:[#allocation3 + $0x5]]
    %v145 = vstv %s144
    %v146 = vmul.f32 %v118, %v145
    %v147 = vadd.f32 %v116, %v146
    %148 = vst.msk [vmem:[#allocation12] sm:$0xff] %vm66, %v147
    %s149 = sld [smem:[#allocation3 + $0x6]]
    %v150 = vstv %s149
    %v151 = vmul.f32 %v118, %v150
    %v152 = vadd.f32 %v116, %v151
    %153 = vst.msk [vmem:[#allocation14] sm:$0xff] %vm66, %v152
    %s154 = sld [smem:[#allocation3 + $0x7]]
    %v155 = vstv %s154
    %v156 = vmul.f32 %v118, %v155
    %v157 = vadd.f32 %v116, %v156
    %158 = vst.msk [vmem:[#allocation15] sm:$0xff] %vm66, %v157
    %s159 = sld [smem:[#allocation3 + $0x8]]
    %v160 = vstv %s159
    %v161 = vmul.f32 %v118, %v160
    %v162 = vadd.f32 %v116, %v161
    %163 = vst.msk [vmem:[#allocation17] sm:$0xff] %vm66, %v162
    %s164 = sld [smem:[#allocation3 + $0x9]]
    %v165 = vstv %s164
    %v166 = vmul.f32 %v118, %v165
    %v167 = vadd.f32 %v116, %v166
    %168 = vst.msk [vmem:[#allocation18] sm:$0xff] %vm66, %v167
    // Predicated region
    $region14: #{tpu_custom_call.1} parent=1 // pred_check
      _
    $region15: #{tpu_custom_call.1} parent=1 // pred_check_branch
      %170 = sbr.rel (0) target = $region17
    $region16: #{tpu_custom_call.1} parent=1 // pred_region
      %172 = vsyncadd [#allocation5], 0
      %s174 = sshll.u32 [#allocation4], 4
      %s175 = int_to_ptr.vmem [resolvable:$true] %s174
      %s176 = sshll.u32 %s4, 4
      %s177 = int_to_ptr.hbm [resolvable:$true] %s176
      %179 = dma.vmem_to_hbm [thread:$0]  %s175, 128, %s177, [#allocation5]
    $region17: #{tpu_custom_call.1} parent=1 // pred_fallthru
      _
    // Predicated region
    $region18: #{tpu_custom_call.1} parent=1 // pred_check
      _
    $region19: #{tpu_custom_call.1} parent=1 // pred_check_branch
      %181 = sbr.rel (0) target = $region21
    $region20: #{tpu_custom_call.1} parent=1 // pred_region
      %183 = vsyncadd [#allocation7], 0
      %s185 = sshll.u32 [#allocation6], 4
      %s186 = int_to_ptr.vmem [resolvable:$true] %s185
      %s187 = sshll.u32 %s5, 4
      %s188 = int_to_ptr.hbm [resolvable:$true] %s187
      %190 = dma.vmem_to_hbm [thread:$0]  %s186, 128, %s188, [#allocation7]
    $region21: #{tpu_custom_call.1} parent=1 // pred_fallthru
      _
    // Predicated region
    $region22: #{tpu_custom_call.1} parent=1 // pred_check
      _
    $region23: #{tpu_custom_call.1} parent=1 // pred_check_branch
      %192 = sbr.rel (0) target = $region25
    $region24: #{tpu_custom_call.1} parent=1 // pred_region
      %194 = vsyncadd [#allocation7], 0
      %s196 = sshll.u32 [#allocation8], 4
      %s197 = int_to_ptr.vmem [resolvable:$true] %s196
      %s198 = sshll.u32 %s6, 4
      %s199 = int_to_ptr.hbm [resolvable:$true] %s198
      %201 = dma.vmem_to_hbm [thread:$0]  %s197, 128, %s199, [#allocation7]
    $region25: #{tpu_custom_call.1} parent=1 // pred_fallthru
      _
    // Predicated region
    $region26: #{tpu_custom_call.1} parent=1 // pred_check
      _
    $region27: #{tpu_custom_call.1} parent=1 // pred_check_branch
      %203 = sbr.rel (0) target = $region29
    $region28: #{tpu_custom_call.1} parent=1 // pred_region
      %205 = vsyncadd [#allocation10], 0
      %s207 = sshll.u32 [#allocation9], 4
      %s208 = int_to_ptr.vmem [resolvable:$true] %s207
      %s209 = sshll.u32 %s7, 4
      %s210 = int_to_ptr.hbm [resolvable:$true] %s209
      %212 = dma.vmem_to_hbm [thread:$0]  %s208, 128, %s210, [#allocation10]
    $region29: #{tpu_custom_call.1} parent=1 // pred_fallthru
      _
    // Predicated region
    $region30: #{tpu_custom_call.1} parent=1 // pred_check
      _
    $region31: #{tpu_custom_call.1} parent=1 // pred_check_branch
      %214 = sbr.rel (0) target = $region33
    $region32: #{tpu_custom_call.1} parent=1 // pred_region
      %216 = vsyncadd [#allocation10], 0
      %s218 = sshll.u32 [#allocation11], 4
      %s219 = int_to_ptr.vmem [resolvable:$true] %s218
      %s220 = sshll.u32 %s8, 4
      %s221 = int_to_ptr.hbm [resolvable:$true] %s220
      %223 = dma.vmem_to_hbm [thread:$0]  %s219, 128, %s221, [#allocation10]
    $region33: #{tpu_custom_call.1} parent=1 // pred_fallthru
      _
    // Predicated region
    $region34: #{tpu_custom_call.1} parent=1 // pred_check
      _
    $region35: #{tpu_custom_call.1} parent=1 // pred_check_branch
      %225 = sbr.rel (0) target = $region37
    $region36: #{tpu_custom_call.1} parent=1 // pred_region
      %227 = vsyncadd [#allocation13], 0
      %s229 = sshll.u32 [#allocation12], 4
      %s230 = int_to_ptr.vmem [resolvable:$true] %s229
      %s231 = sshll.u32 %s9, 4
      %s232 = int_to_ptr.hbm [resolvable:$true] %s231
      %234 = dma.vmem_to_hbm [thread:$0]  %s230, 128, %s232, [#allocation13]
    $region37: #{tpu_custom_call.1} parent=1 // pred_fallthru
      _
    // Predicated region
    $region38: #{tpu_custom_call.1} parent=1 // pred_check
      _
    $region39: #{tpu_custom_call.1} parent=1 // pred_check_branch
      %236 = sbr.rel (0) target = $region41
    $region40: #{tpu_custom_call.1} parent=1 // pred_region
      %238 = vsyncadd [#allocation13], 0
      %s240 = sshll.u32 [#allocation14], 4
      %s241 = int_to_ptr.vmem [resolvable:$true] %s240
      %s242 = sshll.u32 %s10, 4
      %s243 = int_to_ptr.hbm [resolvable:$true] %s242
      %245 = dma.vmem_to_hbm [thread:$0]  %s241, 128, %s243, [#allocation13]
    $region41: #{tpu_custom_call.1} parent=1 // pred_fallthru
      _
    // Predicated region
    $region42: #{tpu_custom_call.1} parent=1 // pred_check
      _
    $region43: #{tpu_custom_call.1} parent=1 // pred_check_branch
      %247 = sbr.rel (0) target = $region45
    $region44: #{tpu_custom_call.1} parent=1 // pred_region
      %249 = vsyncadd [#allocation16], 0
      %s251 = sshll.u32 [#allocation15], 4
      %s252 = int_to_ptr.vmem [resolvable:$true] %s251
      %s253 = sshll.u32 %s11, 4
      %s254 = int_to_ptr.hbm [resolvable:$true] %s253
      %256 = dma.vmem_to_hbm [thread:$0]  %s252, 128, %s254, [#allocation16]
    $region45: #{tpu_custom_call.1} parent=1 // pred_fallthru
      _
    // Predicated region
    $region46: #{tpu_custom_call.1} parent=1 // pred_check
      _
    $region47: #{tpu_custom_call.1} parent=1 // pred_check_branch
      %258 = sbr.rel (0) target = $region49
    $region48: #{tpu_custom_call.1} parent=1 // pred_region
      %260 = vsyncadd [#allocation16], 0
      %s262 = sshll.u32 [#allocation17], 4
      %s263 = int_to_ptr.vmem [resolvable:$true] %s262
      %s264 = sshll.u32 %s12, 4
      %s265 = int_to_ptr.hbm [resolvable:$true] %s264
      %267 = dma.vmem_to_hbm [thread:$0]  %s263, 128, %s265, [#allocation16]
    $region49: #{tpu_custom_call.1} parent=1 // pred_fallthru
      _
    // Predicated region
    $region50: #{tpu_custom_call.1} parent=1 // pred_check
      _
    $region51: #{tpu_custom_call.1} parent=1 // pred_check_branch
      %269 = sbr.rel (0) target = $region53
    $region52: #{tpu_custom_call.1} parent=1 // pred_region
      %271 = vsyncadd [#allocation19], 0
      %s273 = sshll.u32 [#allocation18], 4
      %s274 = int_to_ptr.vmem [resolvable:$true] %s273
      %s275 = sshll.u32 %s13, 4
      %s276 = int_to_ptr.hbm [resolvable:$true] %s275
      %278 = dma.vmem_to_hbm [thread:$0]  %s274, 128, %s276, [#allocation19]
    $region53: #{tpu_custom_call.1} parent=1 // pred_fallthru
      _
    // Predicated region
    $region54: #{tpu_custom_call.1} parent=1 // pred_check
      _
    $region55: #{tpu_custom_call.1} parent=1 // pred_check_branch
      %280 = sbr.rel (0) target = $region57
    $region56: #{tpu_custom_call.1} parent=1 // pred_region
      %282 = dma.done [#allocation5], 128
    $region57: #{tpu_custom_call.1} parent=1 // pred_fallthru
      _
    // Predicated region
    $region58: #{tpu_custom_call.1} parent=1 // pred_check
      _
    $region59: #{tpu_custom_call.1} parent=1 // pred_check_branch
      %284 = sbr.rel (0) target = $region61
    $region60: #{tpu_custom_call.1} parent=1 // pred_region
      %286 = dma.done [#allocation7], 128
    $region61: #{tpu_custom_call.1} parent=1 // pred_fallthru
      _
    // Predicated region
    $region62: #{tpu_custom_call.1} parent=1 // pred_check
      _
    $region63: #{tpu_custom_call.1} parent=1 // pred_check_branch
      %288 = sbr.rel (0) target = $region65
    $region64: #{tpu_custom_call.1} parent=1 // pred_region
      %290 = dma.done [#allocation7], 128
    $region65: #{tpu_custom_call.1} parent=1 // pred_fallthru
      _
    // Predicated region
    $region66: #{tpu_custom_call.1} parent=1 // pred_check
      _
    $region67: #{tpu_custom_call.1} parent=1 // pred_check_branch
      %292 = sbr.rel (0) target = $region69
    $region68: #{tpu_custom_call.1} parent=1 // pred_region
      %294 = dma.done [#allocation10], 128
    $region69: #{tpu_custom_call.1} parent=1 // pred_fallthru
      _
    // Predicated region
    $region70: #{tpu_custom_call.1} parent=1 // pred_check
      _
    $region71: #{tpu_custom_call.1} parent=1 // pred_check_branch
      %296 = sbr.rel (0) target = $region73
    $region72: #{tpu_custom_call.1} parent=1 // pred_region
      %298 = dma.done [#allocation10], 128
    $region73: #{tpu_custom_call.1} parent=1 // pred_fallthru
      _
    // Predicated region
    $region74: #{tpu_custom_call.1} parent=1 // pred_check
      _
    $region75: #{tpu_custom_call.1} parent=1 // pred_check_branch
      %300 = sbr.rel (0) target = $region77
    $region76: #{tpu_custom_call.1} parent=1 // pred_region
      %302 = dma.done [#allocation13], 128
    $region77: #{tpu_custom_call.1} parent=1 // pred_fallthru
      _
    // Predicated region
    $region78: #{tpu_custom_call.1} parent=1 // pred_check
      _
    $region79: #{tpu_custom_call.1} parent=1 // pred_check_branch
      %304 = sbr.rel (0) target = $region81
    $region80: #{tpu_custom_call.1} parent=1 // pred_region
      %306 = dma.done [#allocation13], 128
    $region81: #{tpu_custom_call.1} parent=1 // pred_fallthru
      _
    // Predicated region
    $region82: #{tpu_custom_call.1} parent=1 // pred_check
      _
    $region83: #{tpu_custom_call.1} parent=1 // pred_check_branch
      %308 = sbr.rel (0) target = $region85
    $region84: #{tpu_custom_call.1} parent=1 // pred_region
      %310 = dma.done [#allocation16], 128
    $region85: #{tpu_custom_call.1} parent=1 // pred_fallthru
      _
    // Predicated region
    $region86: #{tpu_custom_call.1} parent=1 // pred_check
      _
    $region87: #{tpu_custom_call.1} parent=1 // pred_check_branch
      %312 = sbr.rel (0) target = $region89
    $region88: #{tpu_custom_call.1} parent=1 // pred_region
      %314 = dma.done [#allocation16], 128
    $region89: #{tpu_custom_call.1} parent=1 // pred_fallthru
      _
    // Predicated region
    $region90: #{tpu_custom_call.1} parent=1 // pred_check
      _
    $region91: #{tpu_custom_call.1} parent=1 // pred_check_branch
      %316 = sbr.rel (0) target = $region93
    $region92: #{tpu_custom_call.1} parent=1 // pred_region
      %318 = dma.done [#allocation19], 128
    $region93: #{tpu_custom_call.1} parent=1 // pred_fallthru
      _
    %319 = vsyncpa [#allocation5], 1
    %320 = vsyncpa [#allocation7], 1
    %321 = vsyncpa [#allocation10], 1
    %322 = vsyncpa [#allocation13], 1
    %323 = vsyncpa [#allocation16], 1
    %324 = vsyncpa [#allocation19], 1

</llo_original>
